<compile_context>
chip_gen: v6e
topology: v6e:2x2x1
jax: 0.10.0
libtpu: 0.0.40
codegen_flags: <defaults>
</compile_context>

<pallas_src>
import functools

import jax
import jax.numpy as jnp
from jax.experimental import pallas as pl
from jax.experimental.pallas import tpu as pltpu

BN_EPS = 1e-5
LANE = 128


def _round_up(x, m):
    return (x + m - 1) // m * m


# ----------------------------- fused Pallas kernel ---------------------------

def _tcn_fused_kernel(x_ref, w_ref, b_ref, fcw_ref, fcb_ref, o_ref, buf_ref, *,
                      levels, ksize, c_pad, p_max, l0, c_in):
    """Whole TCN + pool + FC for one batch tile.

    x_ref:   [BT, L0, C_in]                 bf16 (un-padded channels)
    w_ref:   [n_levels, K, C_pad, C_pad]    bf16, BN-folded, per-tap slices
    b_ref:   [n_levels, 1, C_pad]           f32, BN-folded bias
    fcw_ref: [C_pad, NC_pad]                bf16, pre-scaled by 1/L_final
    fcb_ref: [1, NC_pad]                    f32
    o_ref:   [BT, NC_pad]                   f32
    buf_ref: [BT, S, C_pad]                 bf16 VMEM scratch (activations + halos)
    """
    bt = x_ref.shape[0]
    n_levels = len(levels)

    # Zero the activation buffer once per grid step: every halo / channel-pad /
    # guard row that is ever read before being written must be exactly zero.
    buf_ref[...] = jnp.zeros_like(buf_ref)

    # Widen channels C_in -> C_pad once inside VMEM and park the input at the
    # sublane-aligned data offset p_max.
    x_wide = jnp.concatenate(
        [x_ref[...], jnp.zeros((bt, l0, c_pad - c_in), jnp.bfloat16)], axis=-1)
    buf_ref[:, p_max:p_max + l0, :] = x_wide

    pooled = None
    for li, (dil, pad, l_out, l_out_c) in enumerate(levels):
        a0 = p_max - pad                      # first row of this level's padded input
        # K accumulated matmuls (one per dilated tap), batch fused into M.
        acc = jnp.zeros((bt * l_out_c, c_pad), jnp.float32)
        for k in range(ksize):
            tap = buf_ref[:, a0 + k * dil:a0 + k * dil + l_out_c, :]   # [BT, l_out_c, C_pad] bf16
            acc = acc + jnp.dot(tap.reshape(bt * l_out_c, c_pad), w_ref[li, k],
                                preferred_element_type=jnp.float32)
        y = jnp.maximum(acc + b_ref[li], 0.0)  # folded BN bias + ReLU, f32 epilogue
        if li < n_levels - 1:
            y3 = y.astype(jnp.bfloat16).reshape(bt, l_out_c, c_pad)
            buf_ref[:, p_max:p_max + l_out, :] = y3[:, :l_out, :]
        else:
            # Last level: time-sum straight off the f32 result (1/L_final folded
            # into the FC weights); no store back to the buffer.
            y3 = y.reshape(bt, l_out_c, c_pad)
            pooled = jnp.sum(y3[:, :l_out, :], axis=1)             # [BT, C_pad] f32

    logits = jnp.dot(pooled.astype(jnp.bfloat16), fcw_ref[...],
                     preferred_element_type=jnp.float32) + fcb_ref[...]
    o_ref[...] = logits


# ------------------------------- JAX wrapper ---------------------------------

def tcn_classifier_forward(x_ncl, params, fc_w, fc_b, *, ksize):
    """x_ncl: [B, input_size, seq_len] (PyTorch NCL layout). Eval-mode forward."""
    # TODO(synk): mask path (masked mean-pool + nearest interpolation) not implemented;
    # this reproduces the mask=None branch of the reference forward.
    B, c_in, L0 = x_ncl.shape
    n_levels = len(params)
    chans = [c_in] + [p["w"].shape[-1] for p in params]
    maxc = max(chans)
    # 128 lanes for small models / v5e; multiple of 256 when real channels >128
    # (v6e/v7x MXU is 256 wide).
    c_pad = LANE if maxc <= LANE else _round_up(maxc, 2 * LANE)
    nc = fc_w.shape[-1]
    nc_pad = _round_up(nc, LANE)

    # Static per-level geometry (no chomp: L grows by (k-1)*2^i per level).
    levels = []
    length = L0
    max_pad = 0
    for i in range(n_levels):
        dil = 2 ** i
        pad = (ksize - 1) * dil
        l_out = length + pad
        l_out_c = _round_up(l_out, 8)         # compute rows rounded to sublanes
        levels.append((dil, pad, l_out, l_out_c))
        max_pad = max(max_pad, pad)
        length = l_out
    l_final = length
    p_max = _round_up(max_pad, 8)             # aligned data offset inside the buffer
    s_rows = _round_up(p_max + l_final + 8, 8)  # +8 guard rows for rounded-up reads

    # Fold BN into conv weight/bias; zero-pad channels; stack all levels.
    w_all = jnp.zeros((n_levels, ksize, c_pad, c_pad), jnp.float32)
    b_all = jnp.zeros((n_levels, 1, c_pad), jnp.float32)
    for i, p in enumerate(params):
        _k, ci, co = p["w"].shape
        scale = p["gamma"][0] * jax.lax.rsqrt(p["var"][0] + BN_EPS)        # [co]
        wf = p["w"] * scale[None, None, :]                                 # [K, ci, co]
        bf = (p["b"][0] - p["mean"][0]) * scale + p["beta"][0]             # [co]
        w_all = w_all.at[i, :, :ci, :co].set(wf)
        b_all = b_all.at[i, 0, :co].set(bf)
    w_all = w_all.astype(jnp.bfloat16)        # [n_levels, K, C_pad, C_pad]

    # Mean-pool folded into FC weights; channel / class dims zero-padded.
    c_last = chans[-1]
    fcw = jnp.zeros((c_pad, nc_pad), jnp.float32).at[:c_last, :nc].set(fc_w / l_final)
    fcw = fcw.astype(jnp.bfloat16)
    fcb = jnp.zeros((1, nc_pad), jnp.float32).at[:, :nc].set(fc_b.reshape(1, nc))

    # Channels-last, UN-padded, bf16 input: minimal HBM footprint / DMA.
    x = jnp.transpose(x_ncl, (0, 2, 1)).astype(jnp.bfloat16)               # [B, L0, C_in]

    # Batch tiling: one tile for small B, 8-element tiles (parallel grid axis,
    # v7x megacore) for larger batches.
    bt = 8 if (B > 8 and B % 8 == 0) else B
    n_bt = B // bt

    kernel = functools.partial(_tcn_fused_kernel, levels=tuple(levels), ksize=ksize,
                               c_pad=c_pad, p_max=p_max, l0=L0, c_in=c_in)
    out = pl.pallas_call(
        kernel,
        out_shape=jax.ShapeDtypeStruct((B, nc_pad), jnp.float32),
        grid=(n_bt,),
        in_specs=[
            pl.BlockSpec((bt, L0, c_in), lambda i: (i, 0, 0)),
            # Invariant operands: constant index_maps -> stay resident across steps.
            pl.BlockSpec((n_levels, ksize, c_pad, c_pad), lambda i: (0, 0, 0, 0)),
            pl.BlockSpec((n_levels, 1, c_pad), lambda i: (0, 0, 0)),
            pl.BlockSpec((c_pad, nc_pad), lambda i: (0, 0)),
            pl.BlockSpec((1, nc_pad), lambda i: (0, 0)),
        ],
        out_specs=pl.BlockSpec((bt, nc_pad), lambda i: (i, 0)),
        scratch_shapes=[pltpu.VMEM((bt, s_rows, c_pad), jnp.bfloat16)],
        compiler_params=pltpu.CompilerParams(
            dimension_semantics=("parallel",),
            # Explicit VMEM budget: headroom under v7x's 64 MiB physical, lifts
            # the 16/32 MiB scoped defaults on v5e/v6e.
            vmem_limit_bytes=48 * 1024 * 1024),
    )(x, w_all, b_all, fcw, fcb)
    return out[:, :nc]


# --------------------------- pure-JAX reference ------------------------------

def tcn_classifier_reference(x_ncl, params, fc_w, fc_b, *, ksize):
    x = jnp.transpose(x_ncl, (0, 2, 1)).astype(jnp.float32)   # [B, L, C]
    for i, p in enumerate(params):
        dil = 2 ** i
        pad = (ksize - 1) * dil
        l_out = x.shape[1] + pad
        xp = jnp.pad(x, ((0, 0), (pad, pad), (0, 0)))
        acc = sum(jnp.einsum("blc,cd->bld", xp[:, k * dil:k * dil + l_out, :],
                             p["w"][k]) for k in range(ksize))
        acc = acc + p["b"]
        inv = jax.lax.rsqrt(p["var"] + BN_EPS)
        y = (acc - p["mean"]) * inv * p["gamma"] + p["beta"]
        x = jnp.maximum(y, 0.0)
    pooled = jnp.mean(x, axis=1)
    return pooled @ fc_w + fc_b


# ------------------------- deterministic parameters --------------------------

def init_params(key, input_size, num_channels, num_classes, ksize):
    params = []
    c_in = input_size
    for c_out in num_channels:
        key, k1, k2, k3, k4, k5, k6 = jax.random.split(key, 7)
        params.append(dict(
            w=0.1 * jax.random.normal(k1, (ksize, c_in, c_out), jnp.float32),
            b=0.1 * jax.random.normal(k2, (1, c_out), jnp.float32),
            gamma=1.0 + 0.1 * jax.random.normal(k3, (1, c_out), jnp.float32),
            beta=0.1 * jax.random.normal(k4, (1, c_out), jnp.float32),
            mean=0.1 * jax.random.normal(k5, (1, c_out), jnp.float32),
            var=jnp.abs(jax.random.normal(k6, (1, c_out), jnp.float32)) + 0.5,
        ))
        c_in = c_out
    key, kf1, kf2 = jax.random.split(key, 3)
    fc_w = 0.1 * jax.random.normal(kf1, (c_in, num_classes), jnp.float32)
    fc_b = 0.1 * jax.random.normal(kf2, (1, num_classes), jnp.float32)
    return params, fc_w, fc_b


if __name__ == "__main__":
    B, input_size, seq_len = 2, 4, 8
    num_channels = [8, 16]
    num_classes = 5
    ksize = 3

    key = jax.random.PRNGKey(0)
    kx, kp = jax.random.split(key)
    x = jax.random.normal(kx, (B, input_size, seq_len), jnp.float32)
    params, fc_w, fc_b = init_params(kp, input_size, num_channels, num_classes, ksize)

    fwd = jax.jit(functools.partial(tcn_classifier_forward, ksize=ksize))
    out = jax.block_until_ready(fwd(x, params, fc_w, fc_b))
    assert out.shape == (B, num_classes), out.shape
    assert bool(jnp.all(jnp.isfinite(out)))

    ref = tcn_classifier_reference(x, params, fc_w, fc_b, ksize=ksize)
    max_err = float(jnp.max(jnp.abs(out - ref)))
    assert max_err < 0.2, f"max abs err vs f32 reference too large: {max_err}"
    print("KERNEL_OK")
</pallas_src>

<mosaic_0001>
module attributes {stable_mosaic.version = 11 : i64} {
  func.func @_tcn_fused_kernel(%arg0: i32, %arg1: memref<2x8x4xbf16, #tpu.memory_space<vmem>>, %arg2: memref<2x3x128x128xbf16, #tpu.memory_space<vmem>>, %arg3: memref<2x1x128xf32, #tpu.memory_space<vmem>>, %arg4: memref<128x128xbf16, #tpu.memory_space<vmem>>, %arg5: memref<1x128xf32, #tpu.memory_space<vmem>>, %arg6: memref<2x128xf32, #tpu.memory_space<vmem>>, %arg7: memref<2x32x128xbf16, #tpu.memory_space<vmem>>) attributes {dimension_semantics = [#tpu.dimension_semantics<parallel>], iteration_bounds = array<i64: 1>, scalar_prefetch = 0 : i64, scratch_operands = 1 : i64, tpu.core_type = #tpu.core_type<tc>, window_params = [{transform_indices = @transform_0, window_bounds = array<i64: 2, 8, 4>}, {pipeline_mode = #tpu.pipeline_mode<synchronous>, transform_indices = @transform_1, window_bounds = array<i64: 2, 3, 128, 128>}, {pipeline_mode = #tpu.pipeline_mode<synchronous>, transform_indices = @transform_2, window_bounds = array<i64: 2, 1, 128>}, {pipeline_mode = #tpu.pipeline_mode<synchronous>, transform_indices = @transform_3, window_bounds = array<i64: 128, 128>}, {pipeline_mode = #tpu.pipeline_mode<synchronous>, transform_indices = @transform_4, window_bounds = array<i64: 1, 128>}, {transform_indices = @transform_5, window_bounds = array<i64: 2, 128>}]} {
    %cst = arith.constant 0.000000e+00 : bf16
    %0 = vector.broadcast %cst : bf16 to vector<2x32x128xbf16>
    %c0 = arith.constant 0 : index
    %c0_0 = arith.constant 0 : index
    %c0_1 = arith.constant 0 : index
    %1 = vector.load %arg7[%c0, %c0_0, %c0_1] : memref<2x32x128xbf16, #tpu.memory_space<vmem>>, vector<2x32x128xbf16>
    tpu.vector_store %arg7[%c0, %c0_0, %c0_1], %0 {strides = array<i32>} : memref<2x32x128xbf16, #tpu.memory_space<vmem>>, vector<2x32x128xbf16>,
    %c0_2 = arith.constant 0 : index
    %c0_3 = arith.constant 0 : index
    %c0_4 = arith.constant 0 : index
    %2 = vector.load %arg1[%c0_2, %c0_3, %c0_4] : memref<2x8x4xbf16, #tpu.memory_space<vmem>>, vector<2x8x4xbf16>
    %cst_5 = arith.constant 0.000000e+00 : bf16
    %3 = vector.broadcast %cst_5 : bf16 to vector<2x8x124xbf16>
    %4 = tpu.concatenate %2, %3 in 2 : vector<2x8x4xbf16>, vector<2x8x124xbf16> -> vector<2x8x128xbf16>
    %c0_6 = arith.constant 0 : index
    %c8 = arith.constant 8 : index
    %c0_7 = arith.constant 0 : index
    %5 = vector.load %arg7[%c0_6, %c8, %c0_7] : memref<2x32x128xbf16, #tpu.memory_space<vmem>>, vector<2x8x128xbf16>
    tpu.vector_store %arg7[%c0_6, %c8, %c0_7], %4 {strides = array<i32>} : memref<2x32x128xbf16, #tpu.memory_space<vmem>>, vector<2x8x128xbf16>,
    %cst_8 = arith.constant 0.000000e+00 : f32
    %6 = vector.broadcast %cst_8 : f32 to vector<32x128xf32>
    %c0_9 = arith.constant 0 : index
    %c6 = arith.constant 6 : index
    %c0_10 = arith.constant 0 : index
    %7 = vector.load %arg7[%c0_9, %c6, %c0_10] : memref<2x32x128xbf16, #tpu.memory_space<vmem>>, vector<2x16x128xbf16>
    %8 = vector.shape_cast %7 : vector<2x16x128xbf16> to vector<32x128xbf16>
    %c0_11 = arith.constant 0 : index
    %c0_12 = arith.constant 0 : index
    %c0_13 = arith.constant 0 : index
    %c0_14 = arith.constant 0 : index
    %9 = vector.load %arg2[%c0_11, %c0_12, %c0_13, %c0_14] : memref<2x3x128x128xbf16, #tpu.memory_space<vmem>>, vector<1x1x128x128xbf16>
    %10 = vector.shape_cast %9 : vector<1x1x128x128xbf16> to vector<128x128xbf16>
    %cst_15 = arith.constant dense<0.000000e+00> : vector<32x128xf32>
    %11 = tpu.matmul %8, %10, %cst_15 {dimension_numbers = #tpu.dot_dimension_numbers<[1], [0], [0], [1], [0, 0, 1, 1], [], []>} : vector<32x128xbf16>, vector<128x128xbf16>, vector<32x128xf32> -> vector<32x128xf32>
    %12 = arith.addf %6, %11 : vector<32x128xf32>
    %c0_16 = arith.constant 0 : index
    %c7 = arith.constant 7 : index
    %c0_17 = arith.constant 0 : index
    %13 = vector.load %arg7[%c0_16, %c7, %c0_17] : memref<2x32x128xbf16, #tpu.memory_space<vmem>>, vector<2x16x128xbf16>
    %14 = vector.shape_cast %13 : vector<2x16x128xbf16> to vector<32x128xbf16>
    %c0_18 = arith.constant 0 : index
    %c1 = arith.constant 1 : index
    %c0_19 = arith.constant 0 : index
    %c0_20 = arith.constant 0 : index
    %15 = vector.load %arg2[%c0_18, %c1, %c0_19, %c0_20] : memref<2x3x128x128xbf16, #tpu.memory_space<vmem>>, vector<1x1x128x128xbf16>
    %16 = vector.shape_cast %15 : vector<1x1x128x128xbf16> to vector<128x128xbf16>
    %cst_21 = arith.constant dense<0.000000e+00> : vector<32x128xf32>
    %17 = tpu.matmul %14, %16, %cst_21 {dimension_numbers = #tpu.dot_dimension_numbers<[1], [0], [0], [1], [0, 0, 1, 1], [], []>} : vector<32x128xbf16>, vector<128x128xbf16>, vector<32x128xf32> -> vector<32x128xf32>
    %18 = arith.addf %12, %17 : vector<32x128xf32>
    %c0_22 = arith.constant 0 : index
    %c8_23 = arith.constant 8 : index
    %c0_24 = arith.constant 0 : index
    %19 = vector.load %arg7[%c0_22, %c8_23, %c0_24] : memref<2x32x128xbf16, #tpu.memory_space<vmem>>, vector<2x16x128xbf16>
    %20 = vector.shape_cast %19 : vector<2x16x128xbf16> to vector<32x128xbf16>
    %c0_25 = arith.constant 0 : index
    %c2 = arith.constant 2 : index
    %c0_26 = arith.constant 0 : index
    %c0_27 = arith.constant 0 : index
    %21 = vector.load %arg2[%c0_25, %c2, %c0_26, %c0_27] : memref<2x3x128x128xbf16, #tpu.memory_space<vmem>>, vector<1x1x128x128xbf16>
    %22 = vector.shape_cast %21 : vector<1x1x128x128xbf16> to vector<128x128xbf16>
    %cst_28 = arith.constant dense<0.000000e+00> : vector<32x128xf32>
    %23 = tpu.matmul %20, %22, %cst_28 {dimension_numbers = #tpu.dot_dimension_numbers<[1], [0], [0], [1], [0, 0, 1, 1], [], []>} : vector<32x128xbf16>, vector<128x128xbf16>, vector<32x128xf32> -> vector<32x128xf32>
    %24 = arith.addf %18, %23 : vector<32x128xf32>
    %c0_29 = arith.constant 0 : index
    %c0_30 = arith.constant 0 : index
    %c0_31 = arith.constant 0 : index
    %25 = vector.load %arg3[%c0_29, %c0_30, %c0_31] : memref<2x1x128xf32, #tpu.memory_space<vmem>>, vector<1x1x128xf32>
    %26 = vector.shape_cast %25 : vector<1x1x128xf32> to vector<1x128xf32>
    %27 = vector.broadcast %26 : vector<1x128xf32> to vector<32x128xf32>
    %28 = arith.addf %24, %27 : vector<32x128xf32>
    %cst_32 = arith.constant 0.000000e+00 : f32
    %29 = vector.broadcast %cst_32 : f32 to vector<32x128xf32>
    %30 = arith.maximumf %28, %29 : vector<32x128xf32>
    %31 = arith.truncf %30 : vector<32x128xf32> to vector<32x128xbf16>
    %32 = vector.shape_cast %31 : vector<32x128xbf16> to vector<2x16x128xbf16>
    %33 = vector.extract_strided_slice %32 {offsets = [0, 0, 0], sizes = [2, 10, 128], strides = [1, 1, 1]} : vector<2x16x128xbf16> to vector<2x10x128xbf16>
    %c0_33 = arith.constant 0 : index
    %c8_34 = arith.constant 8 : index
    %c0_35 = arith.constant 0 : index
    %34 = vector.load %arg7[%c0_33, %c8_34, %c0_35] : memref<2x32x128xbf16, #tpu.memory_space<vmem>>, vector<2x10x128xbf16>
    tpu.vector_store %arg7[%c0_33, %c8_34, %c0_35], %33 {strides = array<i32>} : memref<2x32x128xbf16, #tpu.memory_space<vmem>>, vector<2x10x128xbf16>,
    %cst_36 = arith.constant 0.000000e+00 : f32
    %35 = vector.broadcast %cst_36 : f32 to vector<32x128xf32>
    %c0_37 = arith.constant 0 : index
    %c4 = arith.constant 4 : index
    %c0_38 = arith.constant 0 : index
    %36 = vector.load %arg7[%c0_37, %c4, %c0_38] : memref<2x32x128xbf16, #tpu.memory_space<vmem>>, vector<2x16x128xbf16>
    %37 = vector.shape_cast %36 : vector<2x16x128xbf16> to vector<32x128xbf16>
    %c1_39 = arith.constant 1 : index
    %c0_40 = arith.constant 0 : index
    %c0_41 = arith.constant 0 : index
    %c0_42 = arith.constant 0 : index
    %38 = vector.load %arg2[%c1_39, %c0_40, %c0_41, %c0_42] : memref<2x3x128x128xbf16, #tpu.memory_space<vmem>>, vector<1x1x128x128xbf16>
    %39 = vector.shape_cast %38 : vector<1x1x128x128xbf16> to vector<128x128xbf16>
    %cst_43 = arith.constant dense<0.000000e+00> : vector<32x128xf32>
    %40 = tpu.matmul %37, %39, %cst_43 {dimension_numbers = #tpu.dot_dimension_numbers<[1], [0], [0], [1], [0, 0, 1, 1], [], []>} : vector<32x128xbf16>, vector<128x128xbf16>, vector<32x128xf32> -> vector<32x128xf32>
    %41 = arith.addf %35, %40 : vector<32x128xf32>
    %c0_44 = arith.constant 0 : index
    %c6_45 = arith.constant 6 : index
    %c0_46 = arith.constant 0 : index
    %42 = vector.load %arg7[%c0_44, %c6_45, %c0_46] : memref<2x32x128xbf16, #tpu.memory_space<vmem>>, vector<2x16x128xbf16>
    %43 = vector.shape_cast %42 : vector<2x16x128xbf16> to vector<32x128xbf16>
    %c1_47 = arith.constant 1 : index
    %c1_48 = arith.constant 1 : index
    %c0_49 = arith.constant 0 : index
    %c0_50 = arith.constant 0 : index
    %44 = vector.load %arg2[%c1_47, %c1_48, %c0_49, %c0_50] : memref<2x3x128x128xbf16, #tpu.memory_space<vmem>>, vector<1x1x128x128xbf16>
    %45 = vector.shape_cast %44 : vector<1x1x128x128xbf16> to vector<128x128xbf16>
    %cst_51 = arith.constant dense<0.000000e+00> : vector<32x128xf32>
    %46 = tpu.matmul %43, %45, %cst_51 {dimension_numbers = #tpu.dot_dimension_numbers<[1], [0], [0], [1], [0, 0, 1, 1], [], []>} : vector<32x128xbf16>, vector<128x128xbf16>, vector<32x128xf32> -> vector<32x128xf32>
    %47 = arith.addf %41, %46 : vector<32x128xf32>
    %c0_52 = arith.constant 0 : index
    %c8_53 = arith.constant 8 : index
    %c0_54 = arith.constant 0 : index
    %48 = vector.load %arg7[%c0_52, %c8_53, %c0_54] : memref<2x32x128xbf16, #tpu.memory_space<vmem>>, vector<2x16x128xbf16>
    %49 = vector.shape_cast %48 : vector<2x16x128xbf16> to vector<32x128xbf16>
    %c1_55 = arith.constant 1 : index
    %c2_56 = arith.constant 2 : index
    %c0_57 = arith.constant 0 : index
    %c0_58 = arith.constant 0 : index
    %50 = vector.load %arg2[%c1_55, %c2_56, %c0_57, %c0_58] : memref<2x3x128x128xbf16, #tpu.memory_space<vmem>>, vector<1x1x128x128xbf16>
    %51 = vector.shape_cast %50 : vector<1x1x128x128xbf16> to vector<128x128xbf16>
    %cst_59 = arith.constant dense<0.000000e+00> : vector<32x128xf32>
    %52 = tpu.matmul %49, %51, %cst_59 {dimension_numbers = #tpu.dot_dimension_numbers<[1], [0], [0], [1], [0, 0, 1, 1], [], []>} : vector<32x128xbf16>, vector<128x128xbf16>, vector<32x128xf32> -> vector<32x128xf32>
    %53 = arith.addf %47, %52 : vector<32x128xf32>
    %c1_60 = arith.constant 1 : index
    %c0_61 = arith.constant 0 : index
    %c0_62 = arith.constant 0 : index
    %54 = vector.load %arg3[%c1_60, %c0_61, %c0_62] : memref<2x1x128xf32, #tpu.memory_space<vmem>>, vector<1x1x128xf32>
    %55 = vector.shape_cast %54 : vector<1x1x128xf32> to vector<1x128xf32>
    %56 = vector.broadcast %55 : vector<1x128xf32> to vector<32x128xf32>
    %57 = arith.addf %53, %56 : vector<32x128xf32>
    %cst_63 = arith.constant 0.000000e+00 : f32
    %58 = vector.broadcast %cst_63 : f32 to vector<32x128xf32>
    %59 = arith.maximumf %57, %58 : vector<32x128xf32>
    %60 = vector.shape_cast %59 : vector<32x128xf32> to vector<2x16x128xf32>
    %61 = vector.extract_strided_slice %60 {offsets = [0, 0, 0], sizes = [2, 14, 128], strides = [1, 1, 1]} : vector<2x16x128xf32> to vector<2x14x128xf32>
    %cst_64 = arith.constant dense<0.000000e+00> : vector<2x128xf32>
    %62 = vector.multi_reduction <add>, %61, %cst_64 [1] : vector<2x14x128xf32> to vector<2x128xf32>
    %63 = arith.truncf %62 : vector<2x128xf32> to vector<2x128xbf16>
    %c0_65 = arith.constant 0 : index
    %c0_66 = arith.constant 0 : index
    %64 = vector.load %arg4[%c0_65, %c0_66] : memref<128x128xbf16, #tpu.memory_space<vmem>>, vector<128x128xbf16>
    %cst_67 = arith.constant dense<0.000000e+00> : vector<2x128xf32>
    %65 = tpu.matmul %63, %64, %cst_67 {dimension_numbers = #tpu.dot_dimension_numbers<[1], [0], [0], [1], [0, 0, 1, 1], [], []>} : vector<2x128xbf16>, vector<128x128xbf16>, vector<2x128xf32> -> vector<2x128xf32>
    %c0_68 = arith.constant 0 : index
    %c0_69 = arith.constant 0 : index
    %66 = vector.load %arg5[%c0_68, %c0_69] : memref<1x128xf32, #tpu.memory_space<vmem>>, vector<1x128xf32>
    %67 = vector.broadcast %66 : vector<1x128xf32> to vector<2x128xf32>
    %68 = arith.addf %65, %67 : vector<2x128xf32>
    %c0_70 = arith.constant 0 : index
    %c0_71 = arith.constant 0 : index
    %69 = vector.load %arg6[%c0_70, %c0_71] : memref<2x128xf32, #tpu.memory_space<vmem>>, vector<2x128xf32>
    tpu.vector_store %arg6[%c0_70, %c0_71], %68 {strides = array<i32>} : memref<2x128xf32, #tpu.memory_space<vmem>>, vector<2x128xf32>,
    return
  }
  func.func @transform_0(%arg0: i32) -> (i32, i32, i32) {
    %c0_i32 = arith.constant 0 : i32
    %c0_i32_0 = arith.constant 0 : i32
    %c0_i32_1 = arith.constant 0 : i32
    return %arg0, %c0_i32, %c0_i32_0 : i32, i32, i32
  }
  func.func @transform_1(%arg0: i32) -> (i32, i32, i32, i32) {
    %c0_i32 = arith.constant 0 : i32
    %c0_i32_0 = arith.constant 0 : i32
    %c0_i32_1 = arith.constant 0 : i32
    %c0_i32_2 = arith.constant 0 : i32
    %c0_i32_3 = arith.constant 0 : i32
    return %c0_i32, %c0_i32_0, %c0_i32_1, %c0_i32_2 : i32, i32, i32, i32
  }
  func.func @transform_2(%arg0: i32) -> (i32, i32, i32) {
    %c0_i32 = arith.constant 0 : i32
    %c0_i32_0 = arith.constant 0 : i32
    %c0_i32_1 = arith.constant 0 : i32
    %c0_i32_2 = arith.constant 0 : i32
    return %c0_i32, %c0_i32_0, %c0_i32_1 : i32, i32, i32
  }
  func.func @transform_3(%arg0: i32) -> (i32, i32) {
    %c0_i32 = arith.constant 0 : i32
    %c0_i32_0 = arith.constant 0 : i32
    %c0_i32_1 = arith.constant 0 : i32
    return %c0_i32, %c0_i32_0 : i32, i32
  }
  func.func @transform_4(%arg0: i32) -> (i32, i32) {
    %c0_i32 = arith.constant 0 : i32
    %c0_i32_0 = arith.constant 0 : i32
    %c0_i32_1 = arith.constant 0 : i32
    return %c0_i32, %c0_i32_0 : i32, i32
  }
  func.func @transform_5(%arg0: i32) -> (i32, i32) {
    %c0_i32 = arith.constant 0 : i32
    %c0_i32_0 = arith.constant 0 : i32
    return %arg0, %c0_i32 : i32, i32
  }
}

</mosaic_0001>

<llo_original>
// kernel: tcn_classifier_forward.1
$region0: #{tcn_classifier_forward.1}
  #allocation0 [shape = 'u32[]', space=smem, size = 0x4, offset = 0x4, fixed_abs, tag = 'smem constant byte address 0x4 - core index']
  #allocation1 [shape = 'u32[144,128]{1,0:T(1,128)}', space=vmem, size = 0x12000, scoped, tag = 'internal scratch']
  #allocation2 [shape = 'bf16[2,32,128]{2,1,0:T(8,128)(2,1)}', space=vmem, size = 0x4000, scoped, tag = 'scratch operand']
  %s0 = inlined_call_operand.vmem [shape: bf16[2,8,4], index: 0, kind: input, shape index: {}]
  %s1 = inlined_call_operand.vmem [shape: bf16[2,3,128,128], index: 1, kind: input, shape index: {}]
  %s2 = inlined_call_operand.vmem [shape: f32[2,1,128], index: 2, kind: input, shape index: {}]
  %s3 = inlined_call_operand.vmem [shape: bf16[128,128], index: 3, kind: input, shape index: {}]
  %s4 = inlined_call_operand.vmem [shape: f32[1,128], index: 4, kind: input, shape index: {}]
  %s5 = inlined_call_operand.hbm [shape: f32[2,128], index: 5, kind: output, shape index: {}]
  %s6 = sld [smem:[#allocation0]]
  $region30: #{tcn_classifier_forward.1} parent=0
    _
  %s8 = ssub.s32 1, %s6
  %s9 = scalar_select 0, %s8, %s6
  $region1: #{tcn_classifier_forward.1} parent=0
    #allocation3 [shape = 'u8[1024]{0}', space=vmem, size = 0x400, scoped, tag = 'output window, operand 0, single buffered']
    #allocation4 [shape = 's32[1]{0}', space=sflag, size = 0x4, scoped, tag = 'scoped memory for tcn_classifier_forward.1']
    %10 = vsyncpa [#allocation4], 0
    // Predicated region
    $region2: #{tcn_classifier_forward.1} parent=1 // pred_check
      _
    $region3: #{tcn_classifier_forward.1} parent=1 // pred_check_branch
      %12 = sbr.rel (0) target = $region5
    $region4: #{tcn_classifier_forward.1} parent=1 // pred_region
      _
    $region5: #{tcn_classifier_forward.1} parent=1 // pred_fallthru
      _
    // Predicated region
    $region6: #{tcn_classifier_forward.1} parent=1 // pred_check
      _
    $region7: #{tcn_classifier_forward.1} parent=1 // pred_check_branch
      %14 = sbr.rel (0) target = $region9
    $region8: #{tcn_classifier_forward.1} parent=1 // pred_region
      _
    $region9: #{tcn_classifier_forward.1} parent=1 // pred_fallthru
      _
    // Predicated region
    $region10: #{tcn_classifier_forward.1} parent=1 // pred_check
      _
    $region11: #{tcn_classifier_forward.1} parent=1 // pred_check_branch
      %16 = sbr.rel (0) target = $region13
    $region12: #{tcn_classifier_forward.1} parent=1 // pred_region
      _
    $region13: #{tcn_classifier_forward.1} parent=1 // pred_fallthru
      _
    // Predicated region
    $region14: #{tcn_classifier_forward.1} parent=1 // pred_check
      _
    $region15: #{tcn_classifier_forward.1} parent=1 // pred_check_branch
      %18 = sbr.rel (0) target = $region17
    $region16: #{tcn_classifier_forward.1} parent=1 // pred_region
      _
    $region17: #{tcn_classifier_forward.1} parent=1 // pred_fallthru
      _
    // Predicated region
    $region18: #{tcn_classifier_forward.1} parent=1 // pred_check
      _
    $region19: #{tcn_classifier_forward.1} parent=1 // pred_check_branch
      %20 = sbr.rel (0) target = $region21
    $region20: #{tcn_classifier_forward.1} parent=1 // pred_region
      _
    $region21: #{tcn_classifier_forward.1} parent=1 // pred_fallthru
      _
    %22 = vst [vmem:[#allocation2] sm:$0xf] 0
    %23 = vst [vmem:[#allocation2 + $0x4] sm:$0xf] 0
    %24 = vst [vmem:[#allocation2 + $0x8] sm:$0xf] 0
    %25 = vst [vmem:[#allocation2 + $0xc] sm:$0xf] 0
    %26 = vst [vmem:[#allocation2 + $0x10] sm:$0xf] 0
    %27 = vst [vmem:[#allocation2 + $0x14] sm:$0xf] 0
    %28 = vst [vmem:[#allocation2 + $0x18] sm:$0xf] 0
    %29 = vst [vmem:[#allocation2 + $0x1c] sm:$0xf] 0
    %v30 = vld [vmem:[%s0] sm:$0xf]
    %v31 = vld [vmem:[%s0 + $0x4] sm:$0xf]
    %vm32 = vcmask 31744
    %v35 = vsel %vm32, %v30, 0
    %v38 = vsel %vm32, %v31, 0
    %40 = vst [vmem:[#allocation2 + $0x4] sm:$0xf] %v35
    %41 = vst [vmem:[#allocation2 + $0x14] sm:$0xf] %v38
    %v42 = vld [vmem:[#allocation2] sm:$0x8]
    %v43 = vld [vmem:[#allocation2 + $0x4] sm:$0xf]
    %v44 = vld [vmem:[#allocation2 + $0x8] sm:$0x7]
    %v45 = vld [vmem:[#allocation2 + $0x10] sm:$0x8]
    %v46 = vld [vmem:[#allocation2 + $0x14] sm:$0xf]
    %v47 = vld [vmem:[#allocation2 + $0x18] sm:$0x7]
    %vm54 = vcmask 1040384
    %vm55 = vcmask 1044484
    %vm56 = vmor %vm54, %vm55
    %v57 = vrot.slane %v42, 7
    %v58 = vrot.slane %v57, 4
    %v59 = vrot.slane %v43, 7
    %v60 = vsel %vm56, %v58, %v59
    %v61 = vrot.slane %v59, 4
    %v62 = vrot.slane %v44, 7
    %v63 = vsel %vm56, %v61, %v62
    %v64 = vrot.slane %v45, 7
    %v65 = vrot.slane %v64, 4
    %v66 = vrot.slane %v46, 7
    %v67 = vsel %vm56, %v65, %v66
    %v68 = vrot.slane %v66, 4
    %v69 = vrot.slane %v47, 7
    %v70 = vsel %vm56, %v68, %v69
    %v71 = vld [vmem:[%s1] sm:$0xf]
    %v72 = vld [vmem:[%s1 + $0x4] sm:$0xf]
    %v73 = vld [vmem:[%s1 + $0x8] sm:$0xf]
    %v74 = vld [vmem:[%s1 + $0xc] sm:$0xf]
    %v75 = vld [vmem:[%s1 + $0x10] sm:$0xf]
    %v76 = vld [vmem:[%s1 + $0x14] sm:$0xf]
    %v77 = vld [vmem:[%s1 + $0x18] sm:$0xf]
    %v78 = vld [vmem:[%s1 + $0x1c] sm:$0xf]
    %v79 = vld [vmem:[%s1 + $0x20] sm:$0xf]
    %v80 = vld [vmem:[%s1 + $0x24] sm:$0xf]
    %v81 = vld [vmem:[%s1 + $0x28] sm:$0xf]
    %v82 = vld [vmem:[%s1 + $0x2c] sm:$0xf]
    %v83 = vld [vmem:[%s1 + $0x30] sm:$0xf]
    %v84 = vld [vmem:[%s1 + $0x34] sm:$0xf]
    %v85 = vld [vmem:[%s1 + $0x38] sm:$0xf]
    %v86 = vld [vmem:[%s1 + $0x3c] sm:$0xf]
    %v87 = vld [vmem:[#allocation2 + $0x8] sm:$0xf]
    %v88 = vld [vmem:[#allocation2 + $0x18] sm:$0xf]
    %vm89 = vsmask.f32 256
    %vm90 = vsmask.f32 4368
    %vm91 = vmor %vm89, %vm90
    %v93 = vshrl.u32 %v42, 16
    %v95 = vrot.slane %v93, 7
    %v96 = vrot.slane %v95, 4
    %v98 = vshrl.u32 %v43, 16
    %v100 = vrot.slane %v98, 7
    %v101 = vshll.u32 %v43, 16
    %v103 = vor.u32 %v100, %v101
    %v104 = vsel %vm91, %v96, %v103
    %v105 = vrot.slane %v100, 4
    %v107 = vshrl.u32 %v87, 16
    %v109 = vrot.slane %v107, 7
    %v110 = vshll.u32 %v87, 16
    %v112 = vor.u32 %v109, %v110
    %v113 = vsel %vm91, %v105, %v112
    %v115 = vshrl.u32 %v45, 16
    %v117 = vrot.slane %v115, 7
    %v118 = vrot.slane %v117, 4
    %v120 = vshrl.u32 %v46, 16
    %v122 = vrot.slane %v120, 7
    %v123 = vshll.u32 %v46, 16
    %v125 = vor.u32 %v122, %v123
    %v126 = vsel %vm91, %v118, %v125
    %v127 = vrot.slane %v122, 4
    %v129 = vshrl.u32 %v88, 16
    %v131 = vrot.slane %v129, 7
    %v132 = vshll.u32 %v88, 16
    %v134 = vor.u32 %v131, %v132
    %v135 = vsel %vm91, %v127, %v134
    %s136 = scalar_lea.vmem %s1, 64
    %v137 = vld [vmem:[%s136] sm:$0xf]
    %v138 = vld [vmem:[%s136 + $0x4] sm:$0xf]
    %v139 = vld [vmem:[%s136 + $0x8] sm:$0xf]
    %v140 = vld [vmem:[%s136 + $0xc] sm:$0xf]
    %v141 = vld [vmem:[%s136 + $0x10] sm:$0xf]
    %v142 = vld [vmem:[%s136 + $0x14] sm:$0xf]
    %v143 = vld [vmem:[%s136 + $0x18] sm:$0xf]
    %v144 = vld [vmem:[%s136 + $0x1c] sm:$0xf]
    %v145 = vld [vmem:[%s136 + $0x20] sm:$0xf]
    %v146 = vld [vmem:[%s136 + $0x24] sm:$0xf]
    %v147 = vld [vmem:[%s136 + $0x28] sm:$0xf]
    %v148 = vld [vmem:[%s136 + $0x2c] sm:$0xf]
    %v149 = vld [vmem:[%s136 + $0x30] sm:$0xf]
    %v150 = vld [vmem:[%s136 + $0x34] sm:$0xf]
    %v151 = vld [vmem:[%s136 + $0x38] sm:$0xf]
    %v152 = vld [vmem:[%s136 + $0x3c] sm:$0xf]
    %v153 = vunpack.c.l.b16 %v104
    %v154 = vunpack.c.l.b16 %v113
    %v155 = vunpack.c.l.b16 %v126
    %v156 = vunpack.c.l.b16 %v135
    %v157 = vpack.c.b16 %v154, %v153
    %v158 = vpack.c.b16 %v156, %v155
    %v177 = vunpack.c.l.b16 %v137
    %v178 = vunpack.c.l.b16 %v138
    %v179 = vunpack.c.l.b16 %v139
    %v180 = vunpack.c.l.b16 %v140
    %v181 = vunpack.c.l.b16 %v141
    %v182 = vunpack.c.l.b16 %v142
    %v183 = vunpack.c.l.b16 %v143
    %v184 = vunpack.c.l.b16 %v144
    %v185 = vunpack.c.l.b16 %v145
    %v186 = vunpack.c.l.b16 %v146
    %v187 = vunpack.c.l.b16 %v147
    %v188 = vunpack.c.l.b16 %v148
    %v189 = vunpack.c.l.b16 %v149
    %v190 = vunpack.c.l.b16 %v150
    %v191 = vunpack.c.l.b16 %v151
    %v192 = vunpack.c.l.b16 %v152
    %v193 = vpack.c.b16 %v178, %v177
    %v194 = vpack.c.b16 %v180, %v179
    %v195 = vpack.c.b16 %v182, %v181
    %v196 = vpack.c.b16 %v184, %v183
    %v197 = vpack.c.b16 %v186, %v185
    %v198 = vpack.c.b16 %v188, %v187
    %v199 = vpack.c.b16 %v190, %v189
    %v200 = vpack.c.b16 %v192, %v191
    %209 = vmatprep.subr.bf16.mxu0 0
    %210 = vmatpush1.bf16.msra.mxu0 %v200
    %211 = vmatprep.subr.bf16.mxu0 0
    %212 = vmatpush1.bf16.msra.mxu0 %v199
    %213 = vmatprep.subr.bf16.mxu0 0
    %214 = vmatpush1.bf16.msra.mxu0 %v198
    %215 = vmatprep.subr.bf16.mxu0 0
    %216 = vmatpush1.bf16.msra.mxu0 %v197
    %217 = vmatprep.subr.bf16.mxu0 0
    %218 = vmatpush1.bf16.msra.mxu0 %v196
    %219 = vmatprep.subr.bf16.mxu0 0
    %220 = vmatpush1.bf16.msra.mxu0 %v195
    %221 = vmatprep.subr.bf16.mxu0 0
    %222 = vmatpush1.bf16.msra.mxu0 %v194
    %223 = vmatprep.subr.bf16.mxu0 0
    %224 = vmatpush1.bf16.msra.mxu0 %v193
    %225 = vmatprep.subr.bf16.mxu0 0
    %226 = vmatpush2.bf16.msra.mxu0 0
    %227 = vmatprep.subr.bf16.mxu0 0
    %228 = vmatpush2.bf16.msra.mxu0 0
    %229 = vmatprep.subr.bf16.mxu0 0
    %230 = vmatpush2.bf16.msra.mxu0 0
    %231 = vmatprep.subr.bf16.mxu0 0
    %232 = vmatpush2.bf16.msra.mxu0 0
    %233 = vmatprep.subr.bf16.mxu0 0
    %234 = vmatpush2.bf16.msra.mxu0 0
    %235 = vmatprep.subr.bf16.mxu0 0
    %236 = vmatpush2.bf16.msra.mxu0 0
    %237 = vmatprep.subr.bf16.mxu0 0
    %238 = vmatpush2.bf16.msra.mxu0 0
    %239 = vmatprep.subr.bf16.mxu0 0
    %240 = vmatpush2.bf16.msra.mxu0 0
    %241 = vmatprep.mubr.bf16.mxu0 0
    %242 = vmatmul.mubr.bf16.gmra.mxu0 %v157
    %v243 = vpop.f32.mrf.mxu0
    %v244 = vadd.f32 0.0, %v243
    %v245 = vpop.f32.mrf.mxu0
    %v246 = vpop.f32.mrf.mxu0
    %v247 = vadd.f32 0.0, %v246
    %v248 = vpop.f32.mrf.mxu0
    %249 = vmatprep.mubr.bf16.mxu0 0
    %250 = vmatmul.mubr.bf16.gmra.mxu0 %v158
    %v251 = vpop.f32.mrf.mxu0
    %v252 = vadd.f32 0.0, %v251
    %v253 = vpop.f32.mrf.mxu0
    %v254 = vpop.f32.mrf.mxu0
    %v255 = vadd.f32 0.0, %v254
    %v256 = vpop.f32.mrf.mxu0
    %257 = vdwg.mxu0
    %v258 = vunpack.c.l.b16 %v60
    %v259 = vunpack.c.l.b16 %v63
    %v260 = vunpack.c.l.b16 %v67
    %v261 = vunpack.c.l.b16 %v70
    %v262 = vpack.c.b16 %v259, %v258
    %v263 = vpack.c.b16 %v261, %v260
    %v282 = vunpack.c.l.b16 %v71
    %v283 = vunpack.c.l.b16 %v72
    %v284 = vunpack.c.l.b16 %v73
    %v285 = vunpack.c.l.b16 %v74
    %v286 = vunpack.c.l.b16 %v75
    %v287 = vunpack.c.l.b16 %v76
    %v288 = vunpack.c.l.b16 %v77
    %v289 = vunpack.c.l.b16 %v78
    %v290 = vunpack.c.l.b16 %v79
    %v291 = vunpack.c.l.b16 %v80
    %v292 = vunpack.c.l.b16 %v81
    %v293 = vunpack.c.l.b16 %v82
    %v294 = vunpack.c.l.b16 %v83
    %v295 = vunpack.c.l.b16 %v84
    %v296 = vunpack.c.l.b16 %v85
    %v297 = vunpack.c.l.b16 %v86
    %v298 = vpack.c.b16 %v283, %v282
    %v299 = vpack.c.b16 %v285, %v284
    %v300 = vpack.c.b16 %v287, %v286
    %v301 = vpack.c.b16 %v289, %v288
    %v302 = vpack.c.b16 %v291, %v290
    %v303 = vpack.c.b16 %v293, %v292
    %v304 = vpack.c.b16 %v295, %v294
    %v305 = vpack.c.b16 %v297, %v296
    %314 = vmatprep.subr.bf16.mxu0 0
    %315 = vmatpush1.bf16.msra.mxu0 %v305
    %316 = vmatprep.subr.bf16.mxu0 0
    %317 = vmatpush1.bf16.msra.mxu0 %v304
    %318 = vmatprep.subr.bf16.mxu0 0
    %319 = vmatpush1.bf16.msra.mxu0 %v303
    %320 = vmatprep.subr.bf16.mxu0 0
    %321 = vmatpush1.bf16.msra.mxu0 %v302
    %322 = vmatprep.subr.bf16.mxu0 0
    %323 = vmatpush1.bf16.msra.mxu0 %v301
    %324 = vmatprep.subr.bf16.mxu0 0
    %325 = vmatpush1.bf16.msra.mxu0 %v300
    %326 = vmatprep.subr.bf16.mxu0 0
    %327 = vmatpush1.bf16.msra.mxu0 %v299
    %328 = vmatprep.subr.bf16.mxu0 0
    %329 = vmatpush1.bf16.msra.mxu0 %v298
    %330 = vmatprep.subr.bf16.mxu0 0
    %331 = vmatpush2.bf16.msra.mxu0 0
    %332 = vmatprep.subr.bf16.mxu0 0
    %333 = vmatpush2.bf16.msra.mxu0 0
    %334 = vmatprep.subr.bf16.mxu0 0
    %335 = vmatpush2.bf16.msra.mxu0 0
    %336 = vmatprep.subr.bf16.mxu0 0
    %337 = vmatpush2.bf16.msra.mxu0 0
    %338 = vmatprep.subr.bf16.mxu0 0
    %339 = vmatpush2.bf16.msra.mxu0 0
    %340 = vmatprep.subr.bf16.mxu0 0
    %341 = vmatpush2.bf16.msra.mxu0 0
    %342 = vmatprep.subr.bf16.mxu0 0
    %343 = vmatpush2.bf16.msra.mxu0 0
    %344 = vmatprep.subr.bf16.mxu0 0
    %345 = vmatpush2.bf16.msra.mxu0 0
    %346 = vmatprep.mubr.bf16.mxu0 0
    %347 = vmatmul.mubr.bf16.gmra.mxu0 %v262
    %v348 = vpop.f32.mrf.mxu0
    %v349 = vadd.f32 %v244, %v348
    %v350 = vpop.f32.mrf.mxu0
    %v351 = vpop.f32.mrf.mxu0
    %v352 = vadd.f32 %v247, %v351
    %v353 = vpop.f32.mrf.mxu0
    %354 = vmatprep.mubr.bf16.mxu0 0
    %355 = vmatmul.mubr.bf16.gmra.mxu0 %v263
    %v356 = vpop.f32.mrf.mxu0
    %v357 = vadd.f32 %v252, %v356
    %v358 = vpop.f32.mrf.mxu0
    %v359 = vpop.f32.mrf.mxu0
    %v360 = vadd.f32 %v255, %v359
    %v361 = vpop.f32.mrf.mxu0
    %362 = vdwg.mxu0
    %s363 = scalar_lea.vmem %s1, 128
    %v364 = vld [vmem:[%s363] sm:$0xf]
    %v365 = vld [vmem:[%s363 + $0x4] sm:$0xf]
    %v366 = vld [vmem:[%s363 + $0x8] sm:$0xf]
    %v367 = vld [vmem:[%s363 + $0xc] sm:$0xf]
    %v368 = vld [vmem:[%s363 + $0x10] sm:$0xf]
    %v369 = vld [vmem:[%s363 + $0x14] sm:$0xf]
    %v370 = vld [vmem:[%s363 + $0x18] sm:$0xf]
    %v371 = vld [vmem:[%s363 + $0x1c] sm:$0xf]
    %v372 = vld [vmem:[%s363 + $0x20] sm:$0xf]
    %v373 = vld [vmem:[%s363 + $0x24] sm:$0xf]
    %v374 = vld [vmem:[%s363 + $0x28] sm:$0xf]
    %v375 = vld [vmem:[%s363 + $0x2c] sm:$0xf]
    %v376 = vld [vmem:[%s363 + $0x30] sm:$0xf]
    %v377 = vld [vmem:[%s363 + $0x34] sm:$0xf]
    %v378 = vld [vmem:[%s363 + $0x38] sm:$0xf]
    %v379 = vld [vmem:[%s363 + $0x3c] sm:$0xf]
    %v382 = vunpack.c.l.b16 %v43
    %v383 = vunpack.c.l.b16 %v87
    %v384 = vunpack.c.l.b16 %v46
    %v385 = vunpack.c.l.b16 %v88
    %v386 = vpack.c.b16 %v383, %v382
    %v387 = vpack.c.b16 %v385, %v384
    %v406 = vunpack.c.l.b16 %v364
    %v407 = vunpack.c.l.b16 %v365
    %v408 = vunpack.c.l.b16 %v366
    %v409 = vunpack.c.l.b16 %v367
    %v410 = vunpack.c.l.b16 %v368
    %v411 = vunpack.c.l.b16 %v369
    %v412 = vunpack.c.l.b16 %v370
    %v413 = vunpack.c.l.b16 %v371
    %v414 = vunpack.c.l.b16 %v372
    %v415 = vunpack.c.l.b16 %v373
    %v416 = vunpack.c.l.b16 %v374
    %v417 = vunpack.c.l.b16 %v375
    %v418 = vunpack.c.l.b16 %v376
    %v419 = vunpack.c.l.b16 %v377
    %v420 = vunpack.c.l.b16 %v378
    %v421 = vunpack.c.l.b16 %v379
    %v422 = vpack.c.b16 %v407, %v406
    %v423 = vpack.c.b16 %v409, %v408
    %v424 = vpack.c.b16 %v411, %v410
    %v425 = vpack.c.b16 %v413, %v412
    %v426 = vpack.c.b16 %v415, %v414
    %v427 = vpack.c.b16 %v417, %v416
    %v428 = vpack.c.b16 %v419, %v418
    %v429 = vpack.c.b16 %v421, %v420
    %438 = vmatprep.subr.bf16.mxu0 0
    %439 = vmatpush1.bf16.msra.mxu0 %v429
    %440 = vmatprep.subr.bf16.mxu0 0
    %441 = vmatpush1.bf16.msra.mxu0 %v428
    %442 = vmatprep.subr.bf16.mxu0 0
    %443 = vmatpush1.bf16.msra.mxu0 %v427
    %444 = vmatprep.subr.bf16.mxu0 0
    %445 = vmatpush1.bf16.msra.mxu0 %v426
    %446 = vmatprep.subr.bf16.mxu0 0
    %447 = vmatpush1.bf16.msra.mxu0 %v425
    %448 = vmatprep.subr.bf16.mxu0 0
    %449 = vmatpush1.bf16.msra.mxu0 %v424
    %450 = vmatprep.subr.bf16.mxu0 0
    %451 = vmatpush1.bf16.msra.mxu0 %v423
    %452 = vmatprep.subr.bf16.mxu0 0
    %453 = vmatpush1.bf16.msra.mxu0 %v422
    %454 = vmatprep.subr.bf16.mxu0 0
    %455 = vmatpush2.bf16.msra.mxu0 0
    %456 = vmatprep.subr.bf16.mxu0 0
    %457 = vmatpush2.bf16.msra.mxu0 0
    %458 = vmatprep.subr.bf16.mxu0 0
    %459 = vmatpush2.bf16.msra.mxu0 0
    %460 = vmatprep.subr.bf16.mxu0 0
    %461 = vmatpush2.bf16.msra.mxu0 0
    %462 = vmatprep.subr.bf16.mxu0 0
    %463 = vmatpush2.bf16.msra.mxu0 0
    %464 = vmatprep.subr.bf16.mxu0 0
    %465 = vmatpush2.bf16.msra.mxu0 0
    %466 = vmatprep.subr.bf16.mxu0 0
    %467 = vmatpush2.bf16.msra.mxu0 0
    %468 = vmatprep.subr.bf16.mxu0 0
    %469 = vmatpush2.bf16.msra.mxu0 0
    %470 = vmatprep.mubr.bf16.mxu0 0
    %471 = vmatmul.mubr.bf16.gmra.mxu0 %v386
    %v472 = vpop.f32.mrf.mxu0
    %v473 = vadd.f32 0.0, %v472
    %v474 = vpop.f32.mrf.mxu0
    %v475 = vpop.f32.mrf.mxu0
    %v476 = vadd.f32 0.0, %v475
    %v477 = vpop.f32.mrf.mxu0
    %478 = vmatprep.mubr.bf16.mxu0 0
    %479 = vmatmul.mubr.bf16.gmra.mxu0 %v387
    %v480 = vpop.f32.mrf.mxu0
    %v481 = vadd.f32 0.0, %v480
    %v482 = vpop.f32.mrf.mxu0
    %v483 = vpop.f32.mrf.mxu0
    %v484 = vadd.f32 0.0, %v483
    %v485 = vpop.f32.mrf.mxu0
    %486 = vdwg.mxu0
    %v487 = vadd.f32 %v349, %v473
    %v488 = vadd.f32 %v352, %v476
    %v489 = vadd.f32 %v357, %v481
    %v490 = vadd.f32 %v360, %v484
    %v491 = vld [vmem:[%s2] sm:$0x1]
    %v493 = vlaneseq
    %v494 = vshrl.u32 %v493, 7
    %v495 = vsub.s32 0, %v494
    %v496 = vrot.slane %v491, %v495
    %v498 = vadd.f32 %v487, %v496
    %v499 = vadd.f32 %v488, %v496
    %v500 = vadd.f32 %v489, %v496
    %v501 = vadd.f32 %v490, %v496
    %v502 = vmax.f32 %v498, 0.0
    %v503 = vmax.f32 %v499, 0.0
    %v504 = vmax.f32 %v500, 0.0
    %v505 = vmax.f32 %v501, 0.0
    %v506 = vpack.c.bf16 %v503, %v502
    %v507 = vpack.c.bf16 %v505, %v504
    %v510 = vunpack.c.l.b16 %v506
    %v511 = vunpack.c.h.b16 %v506
    %v512 = vunpack.c.l.b16 %v507
    %v513 = vunpack.c.h.b16 %v507
    %v514 = vpack.c.b16 %v510, %v510
    %v515 = vpack.c.b16 %v511, %v511
    %v516 = vpack.c.b16 %v512, %v512
    %v517 = vpack.c.b16 %v513, %v513
    %522 = vst [vmem:[#allocation2 + $0x4] sm:$0xf] %v514
    %523 = vst [vmem:[#allocation2 + $0x8] sm:$0x1] %v515
    %524 = vst [vmem:[#allocation2 + $0x14] sm:$0xf] %v516
    %525 = vst [vmem:[#allocation2 + $0x18] sm:$0x1] %v517
    %v526 = vld [vmem:[#allocation2] sm:$0xc]
    %v527 = vld [vmem:[#allocation2 + $0x4] sm:$0xf]
    %v528 = vld [vmem:[#allocation2 + $0x8] sm:$0x3]
    %v529 = vld [vmem:[#allocation2 + $0x10] sm:$0xc]
    %v530 = vld [vmem:[#allocation2 + $0x14] sm:$0xf]
    %v531 = vld [vmem:[#allocation2 + $0x18] sm:$0x3]
    %vm538 = vcmask 1041408
    %vm539 = vcmask 1045508
    %vm540 = vmor %vm538, %vm539
    %v541 = vrot.slane %v526, 6
    %v542 = vrot.slane %v541, 4
    %v543 = vrot.slane %v527, 6
    %v544 = vsel %vm540, %v542, %v543
    %v545 = vrot.slane %v543, 4
    %v546 = vrot.slane %v528, 6
    %v547 = vsel %vm540, %v545, %v546
    %v548 = vrot.slane %v529, 6
    %v549 = vrot.slane %v548, 4
    %v550 = vrot.slane %v530, 6
    %v551 = vsel %vm540, %v549, %v550
    %v552 = vrot.slane %v550, 4
    %v553 = vrot.slane %v531, 6
    %v554 = vsel %vm540, %v552, %v553
    %s555 = scalar_lea.vmem %s1, 192
    %v556 = vld [vmem:[%s555] sm:$0xf]
    %v557 = vld [vmem:[%s555 + $0x4] sm:$0xf]
    %v558 = vld [vmem:[%s555 + $0x8] sm:$0xf]
    %v559 = vld [vmem:[%s555 + $0xc] sm:$0xf]
    %v560 = vld [vmem:[%s555 + $0x10] sm:$0xf]
    %v561 = vld [vmem:[%s555 + $0x14] sm:$0xf]
    %v562 = vld [vmem:[%s555 + $0x18] sm:$0xf]
    %v563 = vld [vmem:[%s555 + $0x1c] sm:$0xf]
    %v564 = vld [vmem:[%s555 + $0x20] sm:$0xf]
    %v565 = vld [vmem:[%s555 + $0x24] sm:$0xf]
    %v566 = vld [vmem:[%s555 + $0x28] sm:$0xf]
    %v567 = vld [vmem:[%s555 + $0x2c] sm:$0xf]
    %v568 = vld [vmem:[%s555 + $0x30] sm:$0xf]
    %v569 = vld [vmem:[%s555 + $0x34] sm:$0xf]
    %v570 = vld [vmem:[%s555 + $0x38] sm:$0xf]
    %v571 = vld [vmem:[%s555 + $0x3c] sm:$0xf]
    %v572 = vld [vmem:[#allocation2] sm:$0x8]
    %v573 = vld [vmem:[#allocation2 + $0x8] sm:$0x7]
    %v574 = vld [vmem:[#allocation2 + $0x10] sm:$0x8]
    %v575 = vld [vmem:[#allocation2 + $0x18] sm:$0x7]
    %v580 = vrot.slane %v572, 7
    %v581 = vrot.slane %v580, 4
    %v582 = vrot.slane %v527, 7
    %v583 = vsel %vm56, %v581, %v582
    %v584 = vrot.slane %v582, 4
    %v585 = vrot.slane %v573, 7
    %v586 = vsel %vm56, %v584, %v585
    %v587 = vrot.slane %v574, 7
    %v588 = vrot.slane %v587, 4
    %v589 = vrot.slane %v530, 7
    %v590 = vsel %vm56, %v588, %v589
    %v591 = vrot.slane %v589, 4
    %v592 = vrot.slane %v575, 7
    %v593 = vsel %vm56, %v591, %v592
    %s594 = scalar_lea.vmem %s1, 256
    %v595 = vld [vmem:[%s594] sm:$0xf]
    %v596 = vld [vmem:[%s594 + $0x4] sm:$0xf]
    %v597 = vld [vmem:[%s594 + $0x8] sm:$0xf]
    %v598 = vld [vmem:[%s594 + $0xc] sm:$0xf]
    %v599 = vld [vmem:[%s594 + $0x10] sm:$0xf]
    %v600 = vld [vmem:[%s594 + $0x14] sm:$0xf]
    %v601 = vld [vmem:[%s594 + $0x18] sm:$0xf]
    %v602 = vld [vmem:[%s594 + $0x1c] sm:$0xf]
    %v603 = vld [vmem:[%s594 + $0x20] sm:$0xf]
    %v604 = vld [vmem:[%s594 + $0x24] sm:$0xf]
    %v605 = vld [vmem:[%s594 + $0x28] sm:$0xf]
    %v606 = vld [vmem:[%s594 + $0x2c] sm:$0xf]
    %v607 = vld [vmem:[%s594 + $0x30] sm:$0xf]
    %v608 = vld [vmem:[%s594 + $0x34] sm:$0xf]
    %v609 = vld [vmem:[%s594 + $0x38] sm:$0xf]
    %v610 = vld [vmem:[%s594 + $0x3c] sm:$0xf]
    %v611 = vunpack.c.l.b16 %v583
    %v612 = vunpack.c.l.b16 %v586
    %v613 = vunpack.c.l.b16 %v590
    %v614 = vunpack.c.l.b16 %v593
    %v615 = vpack.c.b16 %v612, %v611
    %v616 = vpack.c.b16 %v614, %v613
    %v635 = vunpack.c.l.b16 %v595
    %v636 = vunpack.c.l.b16 %v596
    %v637 = vunpack.c.l.b16 %v597
    %v638 = vunpack.c.l.b16 %v598
    %v639 = vunpack.c.l.b16 %v599
    %v640 = vunpack.c.l.b16 %v600
    %v641 = vunpack.c.l.b16 %v601
    %v642 = vunpack.c.l.b16 %v602
    %v643 = vunpack.c.l.b16 %v603
    %v644 = vunpack.c.l.b16 %v604
    %v645 = vunpack.c.l.b16 %v605
    %v646 = vunpack.c.l.b16 %v606
    %v647 = vunpack.c.l.b16 %v607
    %v648 = vunpack.c.l.b16 %v608
    %v649 = vunpack.c.l.b16 %v609
    %v650 = vunpack.c.l.b16 %v610
    %v651 = vpack.c.b16 %v636, %v635
    %v652 = vpack.c.b16 %v638, %v637
    %v653 = vpack.c.b16 %v640, %v639
    %v654 = vpack.c.b16 %v642, %v641
    %v655 = vpack.c.b16 %v644, %v643
    %v656 = vpack.c.b16 %v646, %v645
    %v657 = vpack.c.b16 %v648, %v647
    %v658 = vpack.c.b16 %v650, %v649
    %667 = vmatprep.subr.bf16.mxu0 0
    %668 = vmatpush1.bf16.msra.mxu0 %v658
    %669 = vmatprep.subr.bf16.mxu0 0
    %670 = vmatpush1.bf16.msra.mxu0 %v657
    %671 = vmatprep.subr.bf16.mxu0 0
    %672 = vmatpush1.bf16.msra.mxu0 %v656
    %673 = vmatprep.subr.bf16.mxu0 0
    %674 = vmatpush1.bf16.msra.mxu0 %v655
    %675 = vmatprep.subr.bf16.mxu0 0
    %676 = vmatpush1.bf16.msra.mxu0 %v654
    %677 = vmatprep.subr.bf16.mxu0 0
    %678 = vmatpush1.bf16.msra.mxu0 %v653
    %679 = vmatprep.subr.bf16.mxu0 0
    %680 = vmatpush1.bf16.msra.mxu0 %v652
    %681 = vmatprep.subr.bf16.mxu0 0
    %682 = vmatpush1.bf16.msra.mxu0 %v651
    %683 = vmatprep.subr.bf16.mxu0 0
    %684 = vmatpush2.bf16.msra.mxu0 0
    %685 = vmatprep.subr.bf16.mxu0 0
    %686 = vmatpush2.bf16.msra.mxu0 0
    %687 = vmatprep.subr.bf16.mxu0 0
    %688 = vmatpush2.bf16.msra.mxu0 0
    %689 = vmatprep.subr.bf16.mxu0 0
    %690 = vmatpush2.bf16.msra.mxu0 0
    %691 = vmatprep.subr.bf16.mxu0 0
    %692 = vmatpush2.bf16.msra.mxu0 0
    %693 = vmatprep.subr.bf16.mxu0 0
    %694 = vmatpush2.bf16.msra.mxu0 0
    %695 = vmatprep.subr.bf16.mxu0 0
    %696 = vmatpush2.bf16.msra.mxu0 0
    %697 = vmatprep.subr.bf16.mxu0 0
    %698 = vmatpush2.bf16.msra.mxu0 0
    %699 = vmatprep.mubr.bf16.mxu0 0
    %700 = vmatmul.mubr.bf16.gmra.mxu0 %v615
    %v701 = vpop.f32.mrf.mxu0
    %v702 = vadd.f32 0.0, %v701
    %v703 = vpop.f32.mrf.mxu0
    %v704 = vpop.f32.mrf.mxu0
    %v705 = vadd.f32 0.0, %v704
    %v706 = vpop.f32.mrf.mxu0
    %707 = vmatprep.mubr.bf16.mxu0 0
    %708 = vmatmul.mubr.bf16.gmra.mxu0 %v616
    %v709 = vpop.f32.mrf.mxu0
    %v710 = vadd.f32 0.0, %v709
    %v711 = vpop.f32.mrf.mxu0
    %v712 = vpop.f32.mrf.mxu0
    %v713 = vadd.f32 0.0, %v712
    %v714 = vpop.f32.mrf.mxu0
    %715 = vdwg.mxu0
    %v716 = vunpack.c.l.b16 %v544
    %v717 = vunpack.c.l.b16 %v547
    %v718 = vunpack.c.l.b16 %v551
    %v719 = vunpack.c.l.b16 %v554
    %v720 = vpack.c.b16 %v717, %v716
    %v721 = vpack.c.b16 %v719, %v718
    %v740 = vunpack.c.l.b16 %v556
    %v741 = vunpack.c.l.b16 %v557
    %v742 = vunpack.c.l.b16 %v558
    %v743 = vunpack.c.l.b16 %v559
    %v744 = vunpack.c.l.b16 %v560
    %v745 = vunpack.c.l.b16 %v561
    %v746 = vunpack.c.l.b16 %v562
    %v747 = vunpack.c.l.b16 %v563
    %v748 = vunpack.c.l.b16 %v564
    %v749 = vunpack.c.l.b16 %v565
    %v750 = vunpack.c.l.b16 %v566
    %v751 = vunpack.c.l.b16 %v567
    %v752 = vunpack.c.l.b16 %v568
    %v753 = vunpack.c.l.b16 %v569
    %v754 = vunpack.c.l.b16 %v570
    %v755 = vunpack.c.l.b16 %v571
    %v756 = vpack.c.b16 %v741, %v740
    %v757 = vpack.c.b16 %v743, %v742
    %v758 = vpack.c.b16 %v745, %v744
    %v759 = vpack.c.b16 %v747, %v746
    %v760 = vpack.c.b16 %v749, %v748
    %v761 = vpack.c.b16 %v751, %v750
    %v762 = vpack.c.b16 %v753, %v752
    %v763 = vpack.c.b16 %v755, %v754
    %772 = vmatprep.subr.bf16.mxu0 0
    %773 = vmatpush1.bf16.msra.mxu0 %v763
    %774 = vmatprep.subr.bf16.mxu0 0
    %775 = vmatpush1.bf16.msra.mxu0 %v762
    %776 = vmatprep.subr.bf16.mxu0 0
    %777 = vmatpush1.bf16.msra.mxu0 %v761
    %778 = vmatprep.subr.bf16.mxu0 0
    %779 = vmatpush1.bf16.msra.mxu0 %v760
    %780 = vmatprep.subr.bf16.mxu0 0
    %781 = vmatpush1.bf16.msra.mxu0 %v759
    %782 = vmatprep.subr.bf16.mxu0 0
    %783 = vmatpush1.bf16.msra.mxu0 %v758
    %784 = vmatprep.subr.bf16.mxu0 0
    %785 = vmatpush1.bf16.msra.mxu0 %v757
    %786 = vmatprep.subr.bf16.mxu0 0
    %787 = vmatpush1.bf16.msra.mxu0 %v756
    %788 = vmatprep.subr.bf16.mxu0 0
    %789 = vmatpush2.bf16.msra.mxu0 0
    %790 = vmatprep.subr.bf16.mxu0 0
    %791 = vmatpush2.bf16.msra.mxu0 0
    %792 = vmatprep.subr.bf16.mxu0 0
    %793 = vmatpush2.bf16.msra.mxu0 0
    %794 = vmatprep.subr.bf16.mxu0 0
    %795 = vmatpush2.bf16.msra.mxu0 0
    %796 = vmatprep.subr.bf16.mxu0 0
    %797 = vmatpush2.bf16.msra.mxu0 0
    %798 = vmatprep.subr.bf16.mxu0 0
    %799 = vmatpush2.bf16.msra.mxu0 0
    %800 = vmatprep.subr.bf16.mxu0 0
    %801 = vmatpush2.bf16.msra.mxu0 0
    %802 = vmatprep.subr.bf16.mxu0 0
    %803 = vmatpush2.bf16.msra.mxu0 0
    %804 = vmatprep.mubr.bf16.mxu0 0
    %805 = vmatmul.mubr.bf16.gmra.mxu0 %v720
    %v806 = vpop.f32.mrf.mxu0
    %v807 = vadd.f32 %v702, %v806
    %v808 = vpop.f32.mrf.mxu0
    %v809 = vpop.f32.mrf.mxu0
    %v810 = vadd.f32 %v705, %v809
    %v811 = vpop.f32.mrf.mxu0
    %812 = vmatprep.mubr.bf16.mxu0 0
    %813 = vmatmul.mubr.bf16.gmra.mxu0 %v721
    %v814 = vpop.f32.mrf.mxu0
    %v815 = vadd.f32 %v710, %v814
    %v816 = vpop.f32.mrf.mxu0
    %v817 = vpop.f32.mrf.mxu0
    %v818 = vadd.f32 %v713, %v817
    %v819 = vpop.f32.mrf.mxu0
    %820 = vdwg.mxu0
    %v821 = vld [vmem:[#allocation2 + $0x8] sm:$0xf]
    %v822 = vld [vmem:[#allocation2 + $0x18] sm:$0xf]
    %s823 = scalar_lea.vmem %s1, 320
    %v824 = vld [vmem:[%s823] sm:$0xf]
    %v825 = vld [vmem:[%s823 + $0x4] sm:$0xf]
    %v826 = vld [vmem:[%s823 + $0x8] sm:$0xf]
    %v827 = vld [vmem:[%s823 + $0xc] sm:$0xf]
    %v828 = vld [vmem:[%s823 + $0x10] sm:$0xf]
    %v829 = vld [vmem:[%s823 + $0x14] sm:$0xf]
    %v830 = vld [vmem:[%s823 + $0x18] sm:$0xf]
    %v831 = vld [vmem:[%s823 + $0x1c] sm:$0xf]
    %v832 = vld [vmem:[%s823 + $0x20] sm:$0xf]
    %v833 = vld [vmem:[%s823 + $0x24] sm:$0xf]
    %v834 = vld [vmem:[%s823 + $0x28] sm:$0xf]
    %v835 = vld [vmem:[%s823 + $0x2c] sm:$0xf]
    %v836 = vld [vmem:[%s823 + $0x30] sm:$0xf]
    %v837 = vld [vmem:[%s823 + $0x34] sm:$0xf]
    %v838 = vld [vmem:[%s823 + $0x38] sm:$0xf]
    %v839 = vld [vmem:[%s823 + $0x3c] sm:$0xf]
    %v842 = vunpack.c.l.b16 %v527
    %v843 = vunpack.c.l.b16 %v821
    %v844 = vunpack.c.l.b16 %v530
    %v845 = vunpack.c.l.b16 %v822
    %v846 = vpack.c.b16 %v843, %v842
    %v847 = vpack.c.b16 %v845, %v844
    %v866 = vunpack.c.l.b16 %v824
    %v867 = vunpack.c.l.b16 %v825
    %v868 = vunpack.c.l.b16 %v826
    %v869 = vunpack.c.l.b16 %v827
    %v870 = vunpack.c.l.b16 %v828
    %v871 = vunpack.c.l.b16 %v829
    %v872 = vunpack.c.l.b16 %v830
    %v873 = vunpack.c.l.b16 %v831
    %v874 = vunpack.c.l.b16 %v832
    %v875 = vunpack.c.l.b16 %v833
    %v876 = vunpack.c.l.b16 %v834
    %v877 = vunpack.c.l.b16 %v835
    %v878 = vunpack.c.l.b16 %v836
    %v879 = vunpack.c.l.b16 %v837
    %v880 = vunpack.c.l.b16 %v838
    %v881 = vunpack.c.l.b16 %v839
    %v882 = vpack.c.b16 %v867, %v866
    %v883 = vpack.c.b16 %v869, %v868
    %v884 = vpack.c.b16 %v871, %v870
    %v885 = vpack.c.b16 %v873, %v872
    %v886 = vpack.c.b16 %v875, %v874
    %v887 = vpack.c.b16 %v877, %v876
    %v888 = vpack.c.b16 %v879, %v878
    %v889 = vpack.c.b16 %v881, %v880
    %898 = vmatprep.subr.bf16.mxu0 0
    %899 = vmatpush1.bf16.msra.mxu0 %v889
    %900 = vmatprep.subr.bf16.mxu0 0
    %901 = vmatpush1.bf16.msra.mxu0 %v888
    %902 = vmatprep.subr.bf16.mxu0 0
    %903 = vmatpush1.bf16.msra.mxu0 %v887
    %904 = vmatprep.subr.bf16.mxu0 0
    %905 = vmatpush1.bf16.msra.mxu0 %v886
    %906 = vmatprep.subr.bf16.mxu0 0
    %907 = vmatpush1.bf16.msra.mxu0 %v885
    %908 = vmatprep.subr.bf16.mxu0 0
    %909 = vmatpush1.bf16.msra.mxu0 %v884
    %910 = vmatprep.subr.bf16.mxu0 0
    %911 = vmatpush1.bf16.msra.mxu0 %v883
    %912 = vmatprep.subr.bf16.mxu0 0
    %913 = vmatpush1.bf16.msra.mxu0 %v882
    %914 = vmatprep.subr.bf16.mxu0 0
    %915 = vmatpush2.bf16.msra.mxu0 0
    %916 = vmatprep.subr.bf16.mxu0 0
    %917 = vmatpush2.bf16.msra.mxu0 0
    %918 = vmatprep.subr.bf16.mxu0 0
    %919 = vmatpush2.bf16.msra.mxu0 0
    %920 = vmatprep.subr.bf16.mxu0 0
    %921 = vmatpush2.bf16.msra.mxu0 0
    %922 = vmatprep.subr.bf16.mxu0 0
    %923 = vmatpush2.bf16.msra.mxu0 0
    %924 = vmatprep.subr.bf16.mxu0 0
    %925 = vmatpush2.bf16.msra.mxu0 0
    %926 = vmatprep.subr.bf16.mxu0 0
    %927 = vmatpush2.bf16.msra.mxu0 0
    %928 = vmatprep.subr.bf16.mxu0 0
    %929 = vmatpush2.bf16.msra.mxu0 0
    %930 = vmatprep.mubr.bf16.mxu0 0
    %931 = vmatmul.mubr.bf16.gmra.mxu0 %v846
    %v932 = vpop.f32.mrf.mxu0
    %v933 = vadd.f32 0.0, %v932
    %v934 = vpop.f32.mrf.mxu0
    %v935 = vpop.f32.mrf.mxu0
    %v936 = vadd.f32 0.0, %v935
    %v937 = vpop.f32.mrf.mxu0
    %938 = vmatprep.mubr.bf16.mxu0 0
    %939 = vmatmul.mubr.bf16.gmra.mxu0 %v847
    %v940 = vpop.f32.mrf.mxu0
    %v941 = vadd.f32 0.0, %v940
    %v942 = vpop.f32.mrf.mxu0
    %v943 = vpop.f32.mrf.mxu0
    %v944 = vadd.f32 0.0, %v943
    %v945 = vpop.f32.mrf.mxu0
    %946 = vdwg.mxu0
    %v947 = vadd.f32 %v807, %v933
    %v948 = vadd.f32 %v810, %v936
    %v949 = vadd.f32 %v815, %v941
    %v950 = vadd.f32 %v818, %v944
    %s951 = scalar_lea.vmem %s2, 1
    %v952 = vld [vmem:[%s951] sm:$0x1]
    %v954 = vlaneseq
    %v955 = vshrl.u32 %v954, 7
    %v956 = vsub.s32 0, %v955
    %v957 = vrot.slane %v952, %v956
    %v959 = vadd.f32 %v947, %v957
    %v960 = vadd.f32 %v948, %v957
    %v961 = vadd.f32 %v949, %v957
    %v962 = vadd.f32 %v950, %v957
    %v963 = vmax.f32 %v959, 0.0
    %v964 = vmax.f32 %v960, 0.0
    %v965 = vmax.f32 %v961, 0.0
    %v966 = vmax.f32 %v962, 0.0
    %vm967 = vcmask 1045504
    %v968 = vsel %vm967, %v964, 0.0
    %v969 = vadd.f32 %v963, %v968
    %v970 = vrot.slane %v969, 4
    %v971 = vadd.f32 %v969, %v970
    %v972 = vrot.slane %v971, 2
    %v973 = vadd.f32 %v971, %v972
    %v974 = vrot.slane %v973, 1
    %v975 = vadd.f32 %v973, %v974
    %v976 = vsel %vm967, %v966, 0.0
    %v977 = vadd.f32 %v965, %v976
    %v978 = vrot.slane %v977, 4
    %v979 = vadd.f32 %v977, %v978
    %v980 = vrot.slane %v979, 2
    %v981 = vadd.f32 %v979, %v980
    %v982 = vrot.slane %v981, 1
    %v983 = vadd.f32 %v981, %v982
    %v984 = vpack.c.bf16 %v975, %v975
    %v985 = vpack.c.bf16 %v983, %v983
    %v986 = vld [vmem:[%s3] sm:$0xf]
    %v987 = vld [vmem:[%s3 + $0x4] sm:$0xf]
    %v988 = vld [vmem:[%s3 + $0x8] sm:$0xf]
    %v989 = vld [vmem:[%s3 + $0xc] sm:$0xf]
    %v990 = vld [vmem:[%s3 + $0x10] sm:$0xf]
    %v991 = vld [vmem:[%s3 + $0x14] sm:$0xf]
    %v992 = vld [vmem:[%s3 + $0x18] sm:$0xf]
    %v993 = vld [vmem:[%s3 + $0x1c] sm:$0xf]
    %v994 = vld [vmem:[%s3 + $0x20] sm:$0xf]
    %v995 = vld [vmem:[%s3 + $0x24] sm:$0xf]
    %v996 = vld [vmem:[%s3 + $0x28] sm:$0xf]
    %v997 = vld [vmem:[%s3 + $0x2c] sm:$0xf]
    %v998 = vld [vmem:[%s3 + $0x30] sm:$0xf]
    %v999 = vld [vmem:[%s3 + $0x34] sm:$0xf]
    %v1000 = vld [vmem:[%s3 + $0x38] sm:$0xf]
    %v1001 = vld [vmem:[%s3 + $0x3c] sm:$0xf]
    %v1002 = vld [vmem:[%s4] sm:$0x1]
    %v1004 = vlaneseq
    %v1005 = vshrl.u32 %v1004, 7
    %v1006 = vsub.s32 0, %v1005
    %v1007 = vrot.slane %v1002, %v1006
    %v1011 = vunpack.c.l.b16 %v984
    %v1012 = vunpack.c.l.b16 %v985
    %vm1013 = vcmask 1041409
    %v1014 = vsel %vm1013, %v1012, %v1011
    %v1015 = vpack.c.b16 %v1014, %v1014
    %v1033 = vunpack.c.l.b16 %v986
    %v1034 = vunpack.c.l.b16 %v987
    %v1035 = vunpack.c.l.b16 %v988
    %v1036 = vunpack.c.l.b16 %v989
    %v1037 = vunpack.c.l.b16 %v990
    %v1038 = vunpack.c.l.b16 %v991
    %v1039 = vunpack.c.l.b16 %v992
    %v1040 = vunpack.c.l.b16 %v993
    %v1041 = vunpack.c.l.b16 %v994
    %v1042 = vunpack.c.l.b16 %v995
    %v1043 = vunpack.c.l.b16 %v996
    %v1044 = vunpack.c.l.b16 %v997
    %v1045 = vunpack.c.l.b16 %v998
    %v1046 = vunpack.c.l.b16 %v999
    %v1047 = vunpack.c.l.b16 %v1000
    %v1048 = vunpack.c.l.b16 %v1001
    %v1049 = vpack.c.b16 %v1034, %v1033
    %v1050 = vpack.c.b16 %v1036, %v1035
    %v1051 = vpack.c.b16 %v1038, %v1037
    %v1052 = vpack.c.b16 %v1040, %v1039
    %v1053 = vpack.c.b16 %v1042, %v1041
    %v1054 = vpack.c.b16 %v1044, %v1043
    %v1055 = vpack.c.b16 %v1046, %v1045
    %v1056 = vpack.c.b16 %v1048, %v1047
    %1065 = vmatprep.subr.bf16.mxu0 0
    %1066 = vmatpush1.bf16.msra.mxu0 %v1056
    %1067 = vmatprep.subr.bf16.mxu0 0
    %1068 = vmatpush1.bf16.msra.mxu0 %v1055
    %1069 = vmatprep.subr.bf16.mxu0 0
    %1070 = vmatpush1.bf16.msra.mxu0 %v1054
    %1071 = vmatprep.subr.bf16.mxu0 0
    %1072 = vmatpush1.bf16.msra.mxu0 %v1053
    %1073 = vmatprep.subr.bf16.mxu0 0
    %1074 = vmatpush1.bf16.msra.mxu0 %v1052
    %1075 = vmatprep.subr.bf16.mxu0 0
    %1076 = vmatpush1.bf16.msra.mxu0 %v1051
    %1077 = vmatprep.subr.bf16.mxu0 0
    %1078 = vmatpush1.bf16.msra.mxu0 %v1050
    %1079 = vmatprep.subr.bf16.mxu0 0
    %1080 = vmatpush1.bf16.msra.mxu0 %v1049
    %1081 = vmatprep.subr.bf16.mxu0 0
    %1082 = vmatpush2.bf16.msra.mxu0 0
    %1083 = vmatprep.subr.bf16.mxu0 0
    %1084 = vmatpush2.bf16.msra.mxu0 0
    %1085 = vmatprep.subr.bf16.mxu0 0
    %1086 = vmatpush2.bf16.msra.mxu0 0
    %1087 = vmatprep.subr.bf16.mxu0 0
    %1088 = vmatpush2.bf16.msra.mxu0 0
    %1089 = vmatprep.subr.bf16.mxu0 0
    %1090 = vmatpush2.bf16.msra.mxu0 0
    %1091 = vmatprep.subr.bf16.mxu0 0
    %1092 = vmatpush2.bf16.msra.mxu0 0
    %1093 = vmatprep.subr.bf16.mxu0 0
    %1094 = vmatpush2.bf16.msra.mxu0 0
    %1095 = vmatprep.subr.bf16.mxu0 0
    %1096 = vmatpush2.bf16.msra.mxu0 0
    %1097 = vmatprep.mubr.bf16.mxu0 0
    %1098 = vmatmul.mubr.bf16.gmra.mxu0 %v1015
    %v1099 = vpop.f32.mrf.mxu0
    %v1100 = vadd.f32 %v1007, %v1099
    %v1101 = vpop.f32.mrf.mxu0
    %v1102 = vpop.f32.mrf.mxu0
    %v1103 = vpop.f32.mrf.mxu0
    %1104 = vdwg.mxu0
    %1105 = vst [vmem:[#allocation3] sm:$0x3] %v1100
    // Predicated region
    $region22: #{tcn_classifier_forward.1} parent=1 // pred_check
      _
    $region23: #{tcn_classifier_forward.1} parent=1 // pred_check_branch
      %1107 = sbr.rel (0) target = $region25
    $region24: #{tcn_classifier_forward.1} parent=1 // pred_region
      %s1109 = ssub.s32 32, 32
      %1110 = vsyncadd [#allocation4], %s1109
      %s1112 = sshll.u32 [#allocation3], 4
      %s1113 = int_to_ptr.vmem [resolvable:$true] %s1112
      %1115 = dma.vmem_to_hbm [thread:$0]  %s1113, 32, %s5, [#allocation4]
    $region25: #{tcn_classifier_forward.1} parent=1 // pred_fallthru
      _
    // Predicated region
    $region26: #{tcn_classifier_forward.1} parent=1 // pred_check
      _
    $region27: #{tcn_classifier_forward.1} parent=1 // pred_check_branch
      %1117 = sbr.rel (0) target = $region29
    $region28: #{tcn_classifier_forward.1} parent=1 // pred_region
      %1118 = dma.done [#allocation4], 32
    $region29: #{tcn_classifier_forward.1} parent=1 // pred_fallthru
      _
    %1119 = vsyncpa [#allocation4], 1

</llo_original>
